<compile_context>
chip_gen: v5e
topology: v5e:2x2
jax: 0.10.0
libtpu: 0.0.40
codegen_flags: <defaults>
</compile_context>

<pallas_src>
import math

import jax
import jax.numpy as jnp
from jax.experimental import pallas as pl
from jax.experimental.pallas import tpu as pltpu


def _add_pos_kernel(x_ref, pos_ref, o_ref):
    # 3D path: x_ref (ts, tb, E), pos_ref (ts, 1, E) -> broadcast over batch.
    # 2D path: x_ref (ts, B*E),   pos_ref (ts, B*E)  -> equal shapes.
    o_ref[...] = (x_ref[...] + pos_ref[...]).astype(o_ref.dtype)


def _choose_tiles_3d(S: int, B: int, E: int, itemsize: int, target: int):
    """Pick (ts, tb) so one x block is ~target bytes (1-2 MiB sweet spot)."""
    row_bytes = B * E * itemsize  # one full (B, E) slab per sequence step
    if row_bytes <= target:
        ts = max(1, min(S, target // max(row_bytes, 1)))
        tb = B
    else:
        # A single (B, E) slab is already large: tile the batch dim instead.
        ts = 1
        tb = max(1, min(B, target // max(E * itemsize, 1)))
        if tb < B:
            # sublane-dim blocks must be a multiple of 8 (or the full dim)
            tb = max(8, (tb // 8) * 8)
            tb = min(tb, B)
    return ts, tb


def _choose_tile_s_2d(S: int, row_bytes: int, target: int) -> int:
    """S-tile for the lane-dense (S, B*E) path; ts is a sublane dim here."""
    ts = max(1, min(S, target // max(row_bytes, 1)))
    if ts < S:
        ts = max(8, (ts // 8) * 8)  # (8,128) rule on the second-to-last dim
        ts = min(ts, S)
    return ts


def learnable_positional_encoding_forward(
    x: jax.Array,
    pos_embedding: jax.Array,
    *,
    donate_x: bool = False,
    tile_bytes: int = 2 * 1024 * 1024,
) -> jax.Array:
    """x: (S, B, E); pos_embedding: (maxlen, 1, E). Returns (S, B, E).

    Eval-mode dropout (identity). Set donate_x=True to alias x's HBM buffer to
    the output when x is dead after this op.
    """
    S, B, E = x.shape
    maxlen = pos_embedding.shape[0]
    assert S <= maxlen, f"sequence length {S} exceeds maxlen {maxlen}"

    itemsize = jnp.dtype(x.dtype).itemsize
    io_alias = {0: 0} if donate_x else {}

    if E % 128 == 0:
        # Lane-aligned E: keep (S, B, E) with E on the lane axis; pos_embedding
        # is read directly (zero wrapper glue) and broadcast over batch inside
        # the kernel.
        ts, tb = _choose_tiles_3d(S, B, E, itemsize, tile_bytes)
        grid = (pl.cdiv(S, ts), pl.cdiv(B, tb))
        return pl.pallas_call(
            _add_pos_kernel,
            out_shape=jax.ShapeDtypeStruct((S, B, E), x.dtype),
            grid=grid,
            in_specs=[
                pl.BlockSpec((ts, tb, E), lambda i, j: (i, j, 0)),
                pl.BlockSpec((ts, 1, E), lambda i, j: (i, 0, 0)),
            ],
            out_specs=pl.BlockSpec((ts, tb, E), lambda i, j: (i, j, 0)),
            compiler_params=pltpu.CompilerParams(
                dimension_semantics=("parallel", "parallel"),
                vmem_limit_bytes=32 * 1024 * 1024,
            ),
            input_output_aliases=io_alias,
        )(x, pos_embedding)

    # E not a multiple of 128 (e.g. E=32 demo): fold batch into the lane axis
    # so loads/stores are lane-dense instead of (B,E)-padded-to-(8,128) tiles.
    # pos is pre-broadcast to (S, B*E) in the wrapper (cheap glue; the kernel
    # then does a plain equal-shape add).
    x2 = x.reshape(S, B * E)
    pos2 = jnp.broadcast_to(pos_embedding[:S], (S, B, E)).reshape(S, B * E)

    ts = _choose_tile_s_2d(S, B * E * itemsize, tile_bytes)
    grid = (pl.cdiv(S, ts),)
    out2 = pl.pallas_call(
        _add_pos_kernel,
        out_shape=jax.ShapeDtypeStruct((S, B * E), x.dtype),
        grid=grid,
        in_specs=[
            pl.BlockSpec((ts, B * E), lambda i: (i, 0)),
            pl.BlockSpec((ts, B * E), lambda i: (i, 0)),
        ],
        out_specs=pl.BlockSpec((ts, B * E), lambda i: (i, 0)),
        compiler_params=pltpu.CompilerParams(
            dimension_semantics=("parallel",),
            vmem_limit_bytes=32 * 1024 * 1024,
        ),
        input_output_aliases=io_alias,
    )(x2, pos2)
    return out2.reshape(S, B, E)


def make_sin_pos_embedding(emb_size: int, maxlen: int, dtype=jnp.float32) -> jax.Array:
    """Deterministic 'sin' init, matching the PyTorch __init__ exactly."""
    den = jnp.exp(-jnp.arange(0, emb_size, 2, dtype=dtype) * (math.log(10000.0) / emb_size))
    pos = jnp.arange(0, maxlen, dtype=dtype).reshape(maxlen, 1)
    pe = jnp.zeros((maxlen, emb_size), dtype=dtype)
    pe = pe.at[:, 0::2].set(jnp.sin(pos * den))
    pe = pe.at[:, 1::2].set(jnp.cos(pos * den))
    return pe[:, None, :]  # (maxlen, 1, emb_size)


if __name__ == "__main__":
    def _check(seq, batch, emb_size, maxlen, tile_bytes=2 * 1024 * 1024):
        key = jax.random.PRNGKey(0)
        x = jax.random.normal(key, (seq, batch, emb_size), dtype=jnp.float32)
        pos_embedding = make_sin_pos_embedding(emb_size, maxlen)

        out = learnable_positional_encoding_forward(x, pos_embedding, tile_bytes=tile_bytes)
        out = jax.block_until_ready(out)

        ref = x + pos_embedding[:seq]  # eval-mode dropout == identity
        assert out.shape == (seq, batch, emb_size)
        assert jnp.allclose(out, ref, atol=1e-6, rtol=1e-6), "mismatch vs reference"

    # Module-like small shape (E=32 < 128 -> lane-dense 2D fallback path).
    _check(seq=8, batch=2, emb_size=32, maxlen=64)

    # Lane-aligned E (3D path); tiny tile_bytes forces a multi-block S grid
    # including a partial trailing S block (21 = 10*2 + 1).
    _check(seq=21, batch=4, emb_size=128, maxlen=64, tile_bytes=4096)

    # Large per-step slab forces batch tiling (tb=8) with a partial B block.
    _check(seq=8, batch=12, emb_size=128, maxlen=64, tile_bytes=4096)

    print("KERNEL_OK")
</pallas_src>

<mosaic_0001>
module attributes {stable_mosaic.version = 11 : i64} {
  func.func @_add_pos_kernel(%arg0: i32, %arg1: memref<8x64xf32, #tpu.memory_space<vmem>>, %arg2: memref<8x64xf32, #tpu.memory_space<vmem>>, %arg3: memref<8x64xf32, #tpu.memory_space<vmem>>) attributes {dimension_semantics = [#tpu.dimension_semantics<parallel>], iteration_bounds = array<i64: 1>, scalar_prefetch = 0 : i64, scratch_operands = 0 : i64, tpu.core_type = #tpu.core_type<tc>, window_params = [{transform_indices = @transform_0, window_bounds = array<i64: 8, 64>}, {transform_indices = @transform_1, window_bounds = array<i64: 8, 64>}, {transform_indices = @transform_2, window_bounds = array<i64: 8, 64>}]} {
    %c0 = arith.constant 0 : index
    %c0_0 = arith.constant 0 : index
    %0 = vector.load %arg1[%c0, %c0_0] : memref<8x64xf32, #tpu.memory_space<vmem>>, vector<8x64xf32>
    %c0_1 = arith.constant 0 : index
    %c0_2 = arith.constant 0 : index
    %1 = vector.load %arg2[%c0_1, %c0_2] : memref<8x64xf32, #tpu.memory_space<vmem>>, vector<8x64xf32>
    %2 = arith.addf %0, %1 : vector<8x64xf32>
    %c0_3 = arith.constant 0 : index
    %c0_4 = arith.constant 0 : index
    %3 = vector.load %arg3[%c0_3, %c0_4] : memref<8x64xf32, #tpu.memory_space<vmem>>, vector<8x64xf32>
    tpu.vector_store %arg3[%c0_3, %c0_4], %2 {strides = array<i32>} : memref<8x64xf32, #tpu.memory_space<vmem>>, vector<8x64xf32>,
    return
  }
  func.func @transform_0(%arg0: i32) -> (i32, i32) {
    %c0_i32 = arith.constant 0 : i32
    %c0_i32_0 = arith.constant 0 : i32
    return %arg0, %c0_i32 : i32, i32
  }
  func.func @transform_1(%arg0: i32) -> (i32, i32) {
    %c0_i32 = arith.constant 0 : i32
    %c0_i32_0 = arith.constant 0 : i32
    return %arg0, %c0_i32 : i32, i32
  }
  func.func @transform_2(%arg0: i32) -> (i32, i32) {
    %c0_i32 = arith.constant 0 : i32
    %c0_i32_0 = arith.constant 0 : i32
    return %arg0, %c0_i32 : i32, i32
  }
}

</mosaic_0001>

<llo_original>
// kernel: tpu_custom_call.1
$region0: #{tpu_custom_call.1}
  #allocation0 [shape = 'u32[]', space=smem, size = 0x4, offset = 0x4, fixed_abs, tag = 'smem constant byte address 0x4 - core index']
  #allocation1 [shape = 'u32[72,128]{1,0:T(1,128)}', space=vmem, size = 0x9000, scoped, tag = 'internal scratch']
  %s0 = inlined_call_operand.hbm [shape: f32[8,64], index: 0, kind: input, shape index: {}]
  %s1 = inlined_call_operand.hbm [shape: f32[8,64], index: 1, kind: input, shape index: {}]
  %s2 = inlined_call_operand.hbm [shape: f32[8,64], index: 2, kind: output, shape index: {}]
  %s3 = sld [smem:[#allocation0]]
  $region26: #{tpu_custom_call.1} parent=0
    _
  %s5 = ssub.s32 1, %s3
  %s6 = scalar_select 0, %s5, %s3
  $region1: #{tpu_custom_call.1} parent=0
    #allocation2 [shape = 'u8[4096]{0}', space=vmem, size = 0x1000, scoped, tag = 'input window, operand 0, single buffered']
    #allocation3 [shape = 's32[1]{0}', space=sflag, size = 0x4, scoped, tag = 'scoped memory for tpu_custom_call.1']
    #allocation4 [shape = 's32[1]{0}', space=sflag, size = 0x4, scoped, tag = 'scoped memory for tpu_custom_call.1']
    #allocation5 [shape = 'u8[4096]{0}', space=vmem, size = 0x1000, scoped, tag = 'input window, operand 1, single buffered']
    #allocation6 [shape = 's32[1]{0}', space=sflag, size = 0x4, scoped, tag = 'scoped memory for tpu_custom_call.1']
    #allocation7 [shape = 'u8[4096]{0}', space=vmem, size = 0x1000, scoped, tag = 'output window, operand 0, single buffered']
    %7 = vsyncpa [#allocation3], 0
    %8 = vsyncpa [#allocation6], 0
    %9 = vsyncpa [#allocation4], 0
    // Predicated region
    $region2: #{tpu_custom_call.1} parent=1 // pred_check
      _
    $region3: #{tpu_custom_call.1} parent=1 // pred_check_branch
      %11 = sbr.rel (0) target = $region5
    $region4: #{tpu_custom_call.1} parent=1 // pred_region
      %13 = vsyncadd [#allocation3], 0
      %s15 = sshll.u32 %s0, 4
      %s16 = int_to_ptr.hbm [resolvable:$true] %s15
      %s17 = sshll.u32 [#allocation2], 4
      %s18 = int_to_ptr.vmem [resolvable:$true] %s17
      %20 = dma.hbm_to_vmem [thread:$0]  %s16, 128, %s18, [#allocation3]
    $region5: #{tpu_custom_call.1} parent=1 // pred_fallthru
      _
    // Predicated region
    $region6: #{tpu_custom_call.1} parent=1 // pred_check
      _
    $region7: #{tpu_custom_call.1} parent=1 // pred_check_branch
      %22 = sbr.rel (0) target = $region9
    $region8: #{tpu_custom_call.1} parent=1 // pred_region
      %24 = vsyncadd [#allocation6], 0
      %s26 = sshll.u32 %s1, 4
      %s27 = int_to_ptr.hbm [resolvable:$true] %s26
      %s28 = sshll.u32 [#allocation5], 4
      %s29 = int_to_ptr.vmem [resolvable:$true] %s28
      %31 = dma.hbm_to_vmem [thread:$0]  %s27, 128, %s29, [#allocation6]
    $region9: #{tpu_custom_call.1} parent=1 // pred_fallthru
      _
    // Predicated region
    $region10: #{tpu_custom_call.1} parent=1 // pred_check
      _
    $region11: #{tpu_custom_call.1} parent=1 // pred_check_branch
      %33 = sbr.rel (0) target = $region13
    $region12: #{tpu_custom_call.1} parent=1 // pred_region
      %35 = dma.done [#allocation3], 128
    $region13: #{tpu_custom_call.1} parent=1 // pred_fallthru
      _
    // Predicated region
    $region14: #{tpu_custom_call.1} parent=1 // pred_check
      _
    $region15: #{tpu_custom_call.1} parent=1 // pred_check_branch
      %37 = sbr.rel (0) target = $region17
    $region16: #{tpu_custom_call.1} parent=1 // pred_region
      %39 = dma.done [#allocation6], 128
    $region17: #{tpu_custom_call.1} parent=1 // pred_fallthru
      _
    %v40 = vld [vmem:[#allocation2] sm:$0xff]
    %v41 = vld [vmem:[#allocation5] sm:$0xff]
    %v42 = vadd.f32 %v40, %v41
    %vm43 = vcmask 523264
    %44 = vst.msk [vmem:[#allocation7] sm:$0xff] %vm43, %v42
    // Predicated region
    $region18: #{tpu_custom_call.1} parent=1 // pred_check
      _
    $region19: #{tpu_custom_call.1} parent=1 // pred_check_branch
      %46 = sbr.rel (0) target = $region21
    $region20: #{tpu_custom_call.1} parent=1 // pred_region
      %48 = vsyncadd [#allocation4], 0
      %s50 = sshll.u32 [#allocation7], 4
      %s51 = int_to_ptr.vmem [resolvable:$true] %s50
      %s52 = sshll.u32 %s2, 4
      %s53 = int_to_ptr.hbm [resolvable:$true] %s52
      %55 = dma.vmem_to_hbm [thread:$0]  %s51, 128, %s53, [#allocation4]
    $region21: #{tpu_custom_call.1} parent=1 // pred_fallthru
      _
    // Predicated region
    $region22: #{tpu_custom_call.1} parent=1 // pred_check
      _
    $region23: #{tpu_custom_call.1} parent=1 // pred_check_branch
      %57 = sbr.rel (0) target = $region25
    $region24: #{tpu_custom_call.1} parent=1 // pred_region
      %59 = dma.done [#allocation4], 128
    $region25: #{tpu_custom_call.1} parent=1 // pred_fallthru
      _
    %60 = vsyncpa [#allocation3], 1
    %61 = vsyncpa [#allocation6], 1
    %62 = vsyncpa [#allocation4], 1

</llo_original>
